<compile_context>
chip_gen: v7x
topology: tpu7x:2x2x1
jax: 0.10.0
libtpu: 0.0.40
codegen_flags: <defaults>
</compile_context>

<pallas_src>
import jax
import jax.numpy as jnp
from jax.experimental import pallas as pl
from jax.experimental.pallas import tpu as pltpu


def _line_fit_kernel(w_ref, x_ref, o_ref):
    # w_ref: SMEM (2,) float32   -- [slope, intercept]
    # x_ref: VMEM (tile_rows, cols) float32
    # o_ref: VMEM (tile_rows, cols) float32
    w0 = w_ref[0]
    w1 = w_ref[1]
    o_ref[...] = w0 * x_ref[...] + w1


def line_fitting_forward(w: jax.Array, x: jax.Array, *,
                         lanes: int = 1024, max_tile_rows: int = 512) -> jax.Array:
    """Pallas equivalent of LineFitting.forward: W[0] * x + W[1].

    w: (2,) float32 parameter vector.
    x: (N,) float32 input vector.
    returns: (N,) float32.
    """
    assert w.shape == (2,)
    assert x.ndim == 1
    n = x.shape[0]
    if n == 0:
        return jnp.zeros((0,), jnp.float32)

    # Tiny inputs (<= one (8,128)-tile worth of data): a single narrow slab.
    cols = 128 if n <= 8 * 128 else lanes

    rows = pl.cdiv(n, cols)
    n_pad = rows * cols  # reshape target; pad is < cols elems (0 on the fast path)

    xf = x if x.dtype == jnp.float32 else x.astype(jnp.float32)
    if n_pad != n:
        xf = jnp.pad(xf, (0, n_pad - n))
    x2d = xf.reshape(rows, cols)  # lane-dense slab (last dim multiple of 128)

    # Tile selection:
    #   rows <= 8  -> single block equal to the full array (tiny case).
    #   rows  > 8  -> at least 2 grid steps (v7x: both TensorCores stream),
    #                 each a multiple of 8 sublanes, capped at max_tile_rows
    #                 (512 x 1024 f32 = 2 MiB -> 8 MiB double-buffered total).
    if rows <= 8:
        tile_rows = rows
    else:
        half = pl.cdiv(pl.cdiv(rows, 2), 8) * 8
        tile_rows = min(max_tile_rows, half)

    grid = (pl.cdiv(rows, tile_rows),)  # partial last block is masked by Pallas

    out = pl.pallas_call(
        _line_fit_kernel,
        out_shape=jax.ShapeDtypeStruct((rows, cols), jnp.float32),
        grid=grid,
        in_specs=[
            pl.BlockSpec(memory_space=pltpu.MemorySpace.SMEM),        # W scalars
            pl.BlockSpec((tile_rows, cols), lambda i: (i, 0)),        # tiled input
        ],
        out_specs=pl.BlockSpec((tile_rows, cols), lambda i: (i, 0)),  # tiled output
        compiler_params=pltpu.CompilerParams(
            dimension_semantics=("parallel",),
        ),
    )(w.astype(jnp.float32), x2d)

    flat = out.reshape(n_pad)
    return flat if n_pad == n else flat[:n]


if __name__ == "__main__":
    key = jax.random.PRNGKey(0)

    # Module-faithful parameter init: W = [0, 0] (float32), as in __init__.
    w_zero = jnp.zeros((2,), dtype=jnp.float32)

    # Input consistent with the module's x = torch.linspace(0, 1, 100).
    n = 100
    x = jnp.linspace(0.0, 1.0, n, dtype=jnp.float32)

    y = line_fitting_forward(w_zero, x)
    jax.block_until_ready(y)
    assert y.shape == (n,) and y.dtype == jnp.float32
    assert jnp.allclose(y, w_zero[0] * x + w_zero[1])

    # Non-trivial deterministic weights: make sure the affine path is computed.
    w_rand = jax.random.normal(key, (2,), dtype=jnp.float32)
    y2 = line_fitting_forward(w_rand, x)
    jax.block_until_ready(y2)
    ref2 = w_rand[0] * x + w_rand[1]
    assert jnp.allclose(y2, ref2, atol=1e-6, rtol=1e-6)

    # Tiled / multi-step grid path with a ragged (masked) last block.
    n_big = 5000
    x_big = jnp.linspace(-2.0, 3.0, n_big, dtype=jnp.float32)
    y3 = line_fitting_forward(w_rand, x_big, lanes=128, max_tile_rows=8)
    jax.block_until_ready(y3)
    ref3 = w_rand[0] * x_big + w_rand[1]
    assert y3.shape == (n_big,)
    assert jnp.allclose(y3, ref3, atol=1e-6, rtol=1e-6)

    # Exact-multiple path: no pad, no output slice (zero wrapper-side copies).
    n_exact = 8 * 1024
    x_exact = jnp.linspace(0.0, 4.0, n_exact, dtype=jnp.float32)
    y4 = line_fitting_forward(w_rand, x_exact)
    jax.block_until_ready(y4)
    ref4 = w_rand[0] * x_exact + w_rand[1]
    assert y4.shape == (n_exact,)
    assert jnp.allclose(y4, ref4, atol=1e-6, rtol=1e-6)

    # Default-lane path that forces a >=2-step grid (both v7x cores stream).
    n_two = 40 * 1024
    x_two = jnp.linspace(-1.0, 1.0, n_two, dtype=jnp.float32)
    y5 = line_fitting_forward(w_rand, x_two)
    jax.block_until_ready(y5)
    ref5 = w_rand[0] * x_two + w_rand[1]
    assert y5.shape == (n_two,)
    assert jnp.allclose(y5, ref5, atol=1e-6, rtol=1e-6)

    print("KERNEL_OK")
</pallas_src>

<mosaic_0001>
module attributes {stable_mosaic.version = 11 : i64} {
  func.func @_line_fit_kernel(%arg0: i32, %arg1: memref<2xf32, #tpu.memory_space<smem>>, %arg2: memref<1x128xf32, #tpu.memory_space<vmem>>, %arg3: memref<1x128xf32, #tpu.memory_space<vmem>>) attributes {dimension_semantics = [#tpu.dimension_semantics<parallel>], iteration_bounds = array<i64: 1>, scalar_prefetch = 0 : i64, scratch_operands = 0 : i64, tpu.core_type = #tpu.core_type<tc>, window_params = [{transform_indices = @transform_0, window_bounds = array<i64: 2>}, {transform_indices = @transform_1, window_bounds = array<i64: 1, 128>}, {transform_indices = @transform_2, window_bounds = array<i64: 1, 128>}]} {
    %c0 = arith.constant 0 : index
    %0 = memref.load %arg1[%c0] : memref<2xf32, #tpu.memory_space<smem>>
    %c1 = arith.constant 1 : index
    %1 = memref.load %arg1[%c1] : memref<2xf32, #tpu.memory_space<smem>>
    %c0_0 = arith.constant 0 : index
    %c0_1 = arith.constant 0 : index
    %2 = vector.load %arg2[%c0_0, %c0_1] : memref<1x128xf32, #tpu.memory_space<vmem>>, vector<1x128xf32>
    %3 = vector.broadcast %0 : f32 to vector<1x128xf32>
    %4 = arith.mulf %3, %2 : vector<1x128xf32>
    %5 = vector.broadcast %1 : f32 to vector<1x128xf32>
    %6 = arith.addf %4, %5 : vector<1x128xf32>
    %c0_2 = arith.constant 0 : index
    %c0_3 = arith.constant 0 : index
    %7 = vector.load %arg3[%c0_2, %c0_3] : memref<1x128xf32, #tpu.memory_space<vmem>>, vector<1x128xf32>
    tpu.vector_store %arg3[%c0_2, %c0_3], %6 {strides = array<i32>} : memref<1x128xf32, #tpu.memory_space<vmem>>, vector<1x128xf32>,
    return
  }
  func.func @transform_0(%arg0: i32) -> i32 {
    %c0_i32 = arith.constant 0 : i32
    %c0_i32_0 = arith.constant 0 : i32
    return %c0_i32 : i32
  }
  func.func @transform_1(%arg0: i32) -> (i32, i32) {
    %c0_i32 = arith.constant 0 : i32
    %c0_i32_0 = arith.constant 0 : i32
    return %arg0, %c0_i32 : i32, i32
  }
  func.func @transform_2(%arg0: i32) -> (i32, i32) {
    %c0_i32 = arith.constant 0 : i32
    %c0_i32_0 = arith.constant 0 : i32
    return %arg0, %c0_i32 : i32, i32
  }
}

</mosaic_0001>

<llo_original>
// kernel: tpu_custom_call.1
$region0: #{tpu_custom_call.1}
  #allocation0 [shape = 'u32[]', space=smem, size = 0x4, offset = 0x4, fixed_abs, tag = 'smem constant byte address 0x4 - core index']
  #allocation1 [shape = 'u32[144,128]{1,0:T(1,128)}', space=vmem, size = 0x12000, scoped, tag = 'internal scratch']
  %s0 = inlined_call_operand.hbm [shape: f32[2], index: 0, kind: input, shape index: {}]
  %s1 = inlined_call_operand.vmem [shape: f32[1,128], index: 1, kind: input, shape index: {}]
  %s2 = inlined_call_operand.hbm [shape: f32[1,128], index: 2, kind: output, shape index: {}]
  %s3 = sld [smem:[#allocation0]]
  $region22: #{tpu_custom_call.1} parent=0
    _
  %s5 = ssub.s32 1, %s3
  %s6 = scalar_select 0, %s5, %s3
  $region1: #{tpu_custom_call.1} parent=0
    #allocation2 [shape = 'u8[512]{0}', space=smem, size = 0x200, scoped, tag = 'input window, operand 0, single buffered']
    #allocation3 [shape = 's32[1]{0}', space=sflag, size = 0x4, scoped, tag = 'scoped memory for tpu_custom_call.1']
    #allocation4 [shape = 's32[1]{0}', space=sflag, size = 0x4, scoped, tag = 'scoped memory for tpu_custom_call.1']
    #allocation5 [shape = 'u8[512]{0}', space=vmem, size = 0x400, scoped, tag = 'output window, operand 0, single buffered']
    %7 = vsyncpa [#allocation4], 0
    %8 = vsyncpa [#allocation3], 0
    // Predicated region
    $region2: #{tpu_custom_call.1} parent=1 // pred_check
      _
    $region3: #{tpu_custom_call.1} parent=1 // pred_check_branch
      %10 = sbr.rel (0) target = $region5
    $region4: #{tpu_custom_call.1} parent=1 // pred_region
      %s12 = ssub.s32 16, 16
      %13 = vsyncadd [#allocation4], %s12
      %16 = dma.hbm_to_smem %s0, 16, [#allocation2], [#allocation4]
    $region5: #{tpu_custom_call.1} parent=1 // pred_fallthru
      _
    // Predicated region
    $region6: #{tpu_custom_call.1} parent=1 // pred_check
      _
    $region7: #{tpu_custom_call.1} parent=1 // pred_check_branch
      %18 = sbr.rel (0) target = $region9
    $region8: #{tpu_custom_call.1} parent=1 // pred_region
      _
    $region9: #{tpu_custom_call.1} parent=1 // pred_fallthru
      _
    // Predicated region
    $region10: #{tpu_custom_call.1} parent=1 // pred_check
      _
    $region11: #{tpu_custom_call.1} parent=1 // pred_check_branch
      %20 = sbr.rel (0) target = $region13
    $region12: #{tpu_custom_call.1} parent=1 // pred_region
      %21 = dma.done [#allocation4], 16
    $region13: #{tpu_custom_call.1} parent=1 // pred_fallthru
      _
    %22 = sfence
    %s23 = sld [smem:[#allocation2]]
    %s24 = sld [smem:[#allocation2 + $0x1]]
    %v25 = vld [vmem:[%s1] sm:$0x1]
    %v26 = vstv %s23
    %v27 = vmul.f32 %v26, %v25
    %v28 = vstv %s24
    %v29 = vadd.f32 %v27, %v28
    %30 = vst [vmem:[#allocation5] sm:$0x1] %v29
    // Predicated region
    $region14: #{tpu_custom_call.1} parent=1 // pred_check
      _
    $region15: #{tpu_custom_call.1} parent=1 // pred_check_branch
      %32 = sbr.rel (0) target = $region17
    $region16: #{tpu_custom_call.1} parent=1 // pred_region
      %s34 = ssub.s32 16, 16
      %35 = vsyncadd [#allocation3], %s34
      %s37 = sshll.u32 [#allocation5], 4
      %s38 = int_to_ptr.vmem [resolvable:$true] %s37
      %40 = dma.vmem_to_hbm [thread:$0]  %s38, 16, %s2, [#allocation3]
    $region17: #{tpu_custom_call.1} parent=1 // pred_fallthru
      _
    // Predicated region
    $region18: #{tpu_custom_call.1} parent=1 // pred_check
      _
    $region19: #{tpu_custom_call.1} parent=1 // pred_check_branch
      %42 = sbr.rel (0) target = $region21
    $region20: #{tpu_custom_call.1} parent=1 // pred_region
      %43 = dma.done [#allocation3], 16
    $region21: #{tpu_custom_call.1} parent=1 // pred_fallthru
      _
    %44 = vsyncpa [#allocation3], 1
    %45 = vsyncpa [#allocation4], 1

</llo_original>
